<compile_context>
chip_gen: v7x
topology: tpu7x:2x2x1
jax: 0.10.0
libtpu: 0.0.40
codegen_flags: <defaults>
</compile_context>

<pallas_src>
import jax
import jax.numpy as jnp
from jax.experimental import pallas as pl
from jax.experimental.pallas import tpu as pltpu


def _ynet_chain_kernel(x_ref, w_ref, b_ref, z2_ref, net_ref):
    """One grid step = one (batch-tile, block) pair.

    Grid = (num_batch_tiles, num_blocks). The block axis is the innermost
    ("arbitrary") axis, so for a fixed batch tile the blocks run in order and
    `net_ref` (VMEM scratch, f32) carries z1 between them.
    """
    blk = pl.program_id(1)
    d = net_ref.shape[1]

    # First block of the chain for this batch tile: seed the carried activation.
    @pl.when(blk == 0)
    def _():
        net_ref[...] = x_ref[...].astype(net_ref.dtype)

    x = net_ref[...].astype(w_ref.dtype)            # compute dtype (f32 or bf16)
    # Single fused matmul: y = x @ [W1 || W2], f32 accumulation on the MXU.
    y = jnp.dot(x, w_ref[0], preferred_element_type=jnp.float32)
    y = y + b_ref[0]                                # f32 bias add (v5e-safe)

    z2_ref[0] = y[:, d:].astype(z2_ref.dtype)       # collected output (lane-dense)
    net_ref[...] = y[:, :d]                         # carry z1 in f32, VMEM-resident


def ynet_with_split(x, weights, biases, *, tm=None, compute_dtype=None):
    """Mirrors YNetWithSplit.forward: returns the list of z2's.

    x:       [B, D]
    weights: [num_blocks, D, 2*D]   (W1 || W2 concatenated on the output axis)
    biases:  [num_blocks, 1, 2*D]   (b1 || b2), kept/used in f32
    """
    nb, d, d2 = weights.shape
    assert d2 == 2 * d, "weights must be W1||W2 concatenated: [nb, D, 2D]"
    b = x.shape[0]

    if compute_dtype is not None:
        x = x.astype(compute_dtype)
        weights = weights.astype(compute_dtype)
    biases = biases.astype(jnp.float32)

    # Batch tile: 8-sublane aligned, capped at 256 rows (fits v7x 64 MiB VMEM
    # comfortably together with the [D, 2D] weight tile, double-buffered).
    if tm is None:
        tm = min(((b + 7) // 8) * 8, 256)
    b_pad = ((b + tm - 1) // tm) * tm
    if b_pad != b:
        x = jnp.pad(x, ((0, b_pad - b), (0, 0)))
    num_m = b_pad // tm

    w_bytes = weights.dtype.itemsize
    a_bytes = x.dtype.itemsize
    # Rough VMEM budget (double-buffered inputs/outputs + f32 scratch).
    vmem_bytes = (2 * d * 2 * d * w_bytes      # weight tile x2 buffers
                  + 2 * 2 * d * 4              # bias tile x2 buffers
                  + 2 * tm * d * a_bytes       # x tile x2 buffers
                  + 2 * tm * d * a_bytes       # z2 out tile x2 buffers
                  + tm * d * 4)                # carried-activation scratch
    vmem_limit = max(32 * 1024 * 1024,
                     min(int(vmem_bytes * 2), 64 * 1024 * 1024))  # v7x-safe cap

    cost = pl.CostEstimate(
        flops=2 * b_pad * d * (2 * d) * nb,
        transcendentals=0,
        bytes_accessed=(weights.size * w_bytes + biases.size * 4
                        + x.size * a_bytes + nb * b_pad * d * a_bytes),
    )

    out = pl.pallas_call(
        _ynet_chain_kernel,
        out_shape=jax.ShapeDtypeStruct((nb, b_pad, d), x.dtype),
        grid_spec=pltpu.PrefetchScalarGridSpec(
            num_scalar_prefetch=0,
            grid=(num_m, nb),
            in_specs=[
                pl.BlockSpec((tm, d), lambda m, i: (m, 0)),          # x tile
                pl.BlockSpec((1, d, 2 * d), lambda m, i: (i, 0, 0)),  # W1||W2 for block i
                pl.BlockSpec((1, 1, 2 * d), lambda m, i: (i, 0, 0)),  # b1||b2 for block i
            ],
            out_specs=pl.BlockSpec((1, tm, d), lambda m, i: (i, m, 0)),
            scratch_shapes=[pltpu.VMEM((tm, d), jnp.float32)],
        ),
        compiler_params=pltpu.CompilerParams(
            dimension_semantics=("parallel", "arbitrary"),
            vmem_limit_bytes=vmem_limit,
        ),
        cost_estimate=cost,
    )(x, weights, biases)

    out = out[:, :b, :]
    return [out[i] for i in range(nb)]


def make_blocks(key, num_blocks, hidden):
    """Deterministic parameter init; returns stacked W1||W2 and b1||b2."""
    k1, k2, k3, k4 = jax.random.split(key, 4)
    scale = 1.0 / jnp.sqrt(hidden)
    w1 = jax.random.normal(k1, (num_blocks, hidden, hidden), jnp.float32) * scale
    w2 = jax.random.normal(k2, (num_blocks, hidden, hidden), jnp.float32) * scale
    b1 = jax.random.normal(k3, (num_blocks, 1, hidden), jnp.float32) * 0.1
    b2 = jax.random.normal(k4, (num_blocks, 1, hidden), jnp.float32) * 0.1
    weights = jnp.concatenate([w1, w2], axis=-1)   # [nb, D, 2D]
    biases = jnp.concatenate([b1, b2], axis=-1)    # [nb, 1, 2D]
    return weights, biases


if __name__ == "__main__":
    key = jax.random.PRNGKey(0)
    kx, kp = jax.random.split(key)

    # 128-aligned hidden for lane-dense stores / full MXU columns.
    batch, hidden, num_blocks = 8, 128, 3
    x = jax.random.normal(kx, (batch, hidden), jnp.float32)
    weights, biases = make_blocks(kp, num_blocks, hidden)

    # f32 path.
    zs = ynet_with_split(x, weights, biases)
    zs = [jax.block_until_ready(z) for z in zs]

    # Plain-JAX reference (same chaining semantics), highest precision.
    hi = jax.lax.Precision.HIGHEST
    refs = []
    net = x
    for i in range(num_blocks):
        w1, w2 = weights[i, :, :hidden], weights[i, :, hidden:]
        b1, b2 = biases[i, :, :hidden], biases[i, :, hidden:]
        refs.append(jnp.dot(net, w2, precision=hi) + b2)
        net = jnp.dot(net, w1, precision=hi) + b1

    for z, zr in zip(zs, refs):
        assert jnp.allclose(z, zr, atol=5e-3, rtol=5e-3)

    # bf16 compute path (v6e/v7x throughput mode); f32 accumulation inside.
    zs_bf16 = ynet_with_split(x, weights, biases, compute_dtype=jnp.bfloat16)
    zs_bf16 = [jax.block_until_ready(z) for z in zs_bf16]
    for z, zr in zip(zs_bf16, refs):
        assert jnp.allclose(z.astype(jnp.float32), zr, atol=0.25, rtol=0.05)

    assert len(zs) == num_blocks
    print("KERNEL_OK")
</pallas_src>

<mosaic_0001>
module attributes {stable_mosaic.version = 11 : i64} {
  func.func @_ynet_chain_kernel(%arg0: i32, %arg1: i32, %arg2: memref<8x128xf32, #tpu.memory_space<vmem>>, %arg3: memref<1x128x256xf32, #tpu.memory_space<vmem>>, %arg4: memref<1x1x256xf32, #tpu.memory_space<vmem>>, %arg5: memref<1x8x128xf32, #tpu.memory_space<vmem>>, %arg6: memref<8x128xf32, #tpu.memory_space<vmem>>) attributes {dimension_semantics = [#tpu.dimension_semantics<parallel>, #tpu.dimension_semantics<arbitrary>], iteration_bounds = array<i64: 1, 3>, scalar_prefetch = 0 : i64, scratch_operands = 1 : i64, tpu.core_type = #tpu.core_type<tc>, window_params = [{transform_indices = @transform_0, window_bounds = array<i64: 8, 128>}, {transform_indices = @transform_1, window_bounds = array<i64: 1, 128, 256>}, {transform_indices = @transform_2, window_bounds = array<i64: 1, 1, 256>}, {transform_indices = @transform_3, window_bounds = array<i64: 1, 8, 128>}]} {
    %c0_i32 = arith.constant 0 : i32
    %0 = arith.cmpi eq, %arg1, %c0_i32 : i32
    %1 = arith.extui %0 : i1 to i32
    %c0_i32_0 = arith.constant 0 : i32
    %2 = arith.cmpi ne, %1, %c0_i32_0 : i32
    scf.if %2 {
      %c0_13 = arith.constant 0 : index
      %c0_14 = arith.constant 0 : index
      %17 = vector.load %arg2[%c0_13, %c0_14] : memref<8x128xf32, #tpu.memory_space<vmem>>, vector<8x128xf32>
      %c0_15 = arith.constant 0 : index
      %c0_16 = arith.constant 0 : index
      %18 = vector.load %arg6[%c0_15, %c0_16] : memref<8x128xf32, #tpu.memory_space<vmem>>, vector<8x128xf32>
      tpu.vector_store %arg6[%c0_15, %c0_16], %17 {strides = array<i32>} : memref<8x128xf32, #tpu.memory_space<vmem>>, vector<8x128xf32>,
    } else {
    }
    %c0 = arith.constant 0 : index
    %c0_1 = arith.constant 0 : index
    %3 = vector.load %arg6[%c0, %c0_1] : memref<8x128xf32, #tpu.memory_space<vmem>>, vector<8x128xf32>
    %c0_2 = arith.constant 0 : index
    %c0_3 = arith.constant 0 : index
    %c0_4 = arith.constant 0 : index
    %4 = vector.load %arg3[%c0_2, %c0_3, %c0_4] : memref<1x128x256xf32, #tpu.memory_space<vmem>>, vector<1x128x256xf32>
    %5 = vector.shape_cast %4 : vector<1x128x256xf32> to vector<128x256xf32>
    %cst = arith.constant dense<0.000000e+00> : vector<8x256xf32>
    %6 = tpu.matmul %3, %5, %cst {dimension_numbers = #tpu.dot_dimension_numbers<[1], [0], [0], [1], [0, 0, 1, 1], [], []>} : vector<8x128xf32>, vector<128x256xf32>, vector<8x256xf32> -> vector<8x256xf32>
    %c0_5 = arith.constant 0 : index
    %c0_6 = arith.constant 0 : index
    %c0_7 = arith.constant 0 : index
    %7 = vector.load %arg4[%c0_5, %c0_6, %c0_7] : memref<1x1x256xf32, #tpu.memory_space<vmem>>, vector<1x1x256xf32>
    %8 = vector.shape_cast %7 : vector<1x1x256xf32> to vector<1x256xf32>
    %9 = vector.broadcast %8 : vector<1x256xf32> to vector<8x256xf32>
    %10 = arith.addf %6, %9 : vector<8x256xf32>
    %11 = vector.extract_strided_slice %10 {offsets = [0, 128], sizes = [8, 128], strides = [1, 1]} : vector<8x256xf32> to vector<8x128xf32>
    %c0_8 = arith.constant 0 : index
    %c0_9 = arith.constant 0 : index
    %c0_10 = arith.constant 0 : index
    %12 = vector.load %arg5[%c0_8, %c0_9, %c0_10] : memref<1x8x128xf32, #tpu.memory_space<vmem>>, vector<1x8x128xf32>
    %13 = vector.shape_cast %12 : vector<1x8x128xf32> to vector<8x128xf32>
    %14 = vector.shape_cast %11 : vector<8x128xf32> to vector<1x8x128xf32>
    tpu.vector_store %arg5[%c0_8, %c0_9, %c0_10], %14 {strides = array<i32>} : memref<1x8x128xf32, #tpu.memory_space<vmem>>, vector<1x8x128xf32>,
    %15 = vector.extract_strided_slice %10 {offsets = [0, 0], sizes = [8, 128], strides = [1, 1]} : vector<8x256xf32> to vector<8x128xf32>
    %c0_11 = arith.constant 0 : index
    %c0_12 = arith.constant 0 : index
    %16 = vector.load %arg6[%c0_11, %c0_12] : memref<8x128xf32, #tpu.memory_space<vmem>>, vector<8x128xf32>
    tpu.vector_store %arg6[%c0_11, %c0_12], %15 {strides = array<i32>} : memref<8x128xf32, #tpu.memory_space<vmem>>, vector<8x128xf32>,
    return
  }
  func.func @transform_0(%arg0: i32, %arg1: i32) -> (i32, i32) {
    %c0_i32 = arith.constant 0 : i32
    %c0_i32_0 = arith.constant 0 : i32
    return %arg0, %c0_i32 : i32, i32
  }
  func.func @transform_1(%arg0: i32, %arg1: i32) -> (i32, i32, i32) {
    %c0_i32 = arith.constant 0 : i32
    %c0_i32_0 = arith.constant 0 : i32
    %c0_i32_1 = arith.constant 0 : i32
    return %arg1, %c0_i32, %c0_i32_0 : i32, i32, i32
  }
  func.func @transform_2(%arg0: i32, %arg1: i32) -> (i32, i32, i32) {
    %c0_i32 = arith.constant 0 : i32
    %c0_i32_0 = arith.constant 0 : i32
    %c0_i32_1 = arith.constant 0 : i32
    return %arg1, %c0_i32, %c0_i32_0 : i32, i32, i32
  }
  func.func @transform_3(%arg0: i32, %arg1: i32) -> (i32, i32, i32) {
    %c0_i32 = arith.constant 0 : i32
    %c0_i32_0 = arith.constant 0 : i32
    return %arg1, %arg0, %c0_i32 : i32, i32, i32
  }
}

</mosaic_0001>

<llo_original>
// kernel: tpu_custom_call.1
$region0: #{tpu_custom_call.1}
  #allocation0 [shape = 'u32[]', space=smem, size = 0x4, offset = 0x4, fixed_abs, tag = 'smem constant byte address 0x4 - core index']
  #allocation1 [shape = 'u32[144,128]{1,0:T(1,128)}', space=vmem, size = 0x12000, scoped, tag = 'internal scratch']
  #allocation2 [shape = 'f32[8,128]{1,0:T(8,128)}', space=vmem, size = 0x1000, scoped, tag = 'scratch operand']
  %s0 = inlined_call_operand.hbm [shape: f32[8,128], index: 0, kind: input, shape index: {}]
  %s1 = inlined_call_operand.hbm [shape: f32[3,128,256], index: 1, kind: input, shape index: {}]
  %s2 = inlined_call_operand.vmem [shape: f32[3,1,256], index: 2, kind: input, shape index: {}]
  %s3 = inlined_call_operand.hbm [shape: f32[3,8,128], index: 3, kind: output, shape index: {}]
  %s4 = sld [smem:[#allocation0]]
  $region57: #{tpu_custom_call.1} parent=0
    _
  %s6 = ssub.s32 1, %s4
  %s7 = scalar_select 0, %s6, %s4
  $region1: #{tpu_custom_call.1} parent=0
    #allocation3 [shape = 'u8[4096]{0}', space=vmem, size = 0x1000, scoped, tag = 'input window, operand 0, single buffered']
    #allocation4 [shape = 's32[2]{0}', space=sflag, size = 0x8, scoped, tag = 'scoped memory for tpu_custom_call.1']
    #allocation5 [shape = 's32[2]{0}', space=sflag, size = 0x8, scoped, tag = 'scoped memory for tpu_custom_call.1']
    #allocation6 [shape = 'u8[262144]{0}', space=vmem, size = 0x40000, scoped, tag = 'input window, operand 1']
    #allocation7 [shape = 's32[2]{0}', space=sflag, size = 0x8, scoped, tag = 'scoped memory for tpu_custom_call.1']
    #allocation8 [shape = 'u8[8192]{0}', space=vmem, size = 0x2000, scoped, tag = 'output window, operand 0']
    %8 = vsyncpa [#allocation4], 0
    %9 = vsyncpa [#allocation7], 0
    %s10 = scalar_lea.sflag [#allocation7], 1
    %11 = vsyncpa %s10, 0
    %12 = vsyncpa [#allocation5], 0
    %s13 = scalar_lea.sflag [#allocation5], 1
    %14 = vsyncpa %s13, 0
    loop: start=0, step=1, limit=5
    $region2: #{tpu_custom_call.1} parent=1 // loop_pre_header
      _
    $region3: #{tpu_custom_call.1} parent=1 // loop_header
      %s16 = sphi 0, %s20
      %p17 = scmp.ge.s32.totalorder %s16, 5
      %s23 = sphi 0, %s35
      %s24 = sphi 0, %s31
      %s25 = sphi 0, %s23
      %s26 = sphi 0, %s24
      %s27 = sphi 0, %s25
      %s28 = sphi 0, %s26
      %s38 = sphi 0, %s40
      %s41 = sphi 0, %s38
      %s42 = sphi 0, %s41
      %s58 = sphi 0, %s42
      %s64 = sphi 0, %s66
      %s67 = sphi 0, %s64
      %s68 = sphi 0, %s67
      %s84 = sphi 0, %s68
      %s90 = sphi 0, %s92
      %s93 = sphi 0, %s90
      %s94 = sphi 0, %s93
      %s110 = sphi 0, %s94
      %s118 = sphi 0, %s120
      %s121 = sphi 0, %s118
      %s122 = sphi 0, %s121
      %s138 = sphi 0, %s122
    $region4: #{tpu_custom_call.1} parent=1 // loop_header_branch
      %19 = sbr.rel (%p17) target = $region8
    $region5: #{tpu_custom_call.1} parent=1 // loop_body
      %s21 = ssub.s32 %s16, 1
      %s22 = ssub.s32 %s16, 2
      %s29 = sadd.s32 1, %s24
      %p30 = scmp.ge.s32.totalorder %s29, 3
      %s31 = scalar_select %p30, 0, %s29
      %s32 = sadd.s32 1, %s23
      %s33 = scalar_select %p30, %s32, %s23
      %p34 = scmp.ge.s32.totalorder %s33, 1
      %s35 = scalar_select %p34, 0, %s33
      %s36 = ssub.s32 %s23, %s35
      %p37 = scmp.eq.s32.totalorder %s36, 0
      %s39 = sadd.s32 %s38, 1
      %s40 = scalar_select %p37, %s38, %s39
      %p43 = pneg %p37
      %p44 = scmp.eq.s32.totalorder %s16, 2
      %p45 = por %p43, %p44
      %p46 = scmp.ne.s32.totalorder %s38, %s41
      %p47 = scmp.eq.s32.totalorder %s16, 0
      %p48 = por %p46, %p47
      %p49 = scmp.ne.s32.totalorder %s38, %s41
      %p50 = scmp.eq.s32.totalorder %s21, 2
      %p51 = por %p49, %p50
      %p52 = scmp.ne.s32.totalorder %s41, %s42
      %p53 = scmp.eq.s32.totalorder %s21, 0
      %p54 = por %p52, %p53
      %p55 = scmp.ne.s32.totalorder %s41, %s42
      %p56 = scmp.eq.s32.totalorder %s22, 2
      %p57 = por %p55, %p56
      %p59 = scmp.ne.s32.totalorder %s42, %s58
      %p60 = scmp.eq.s32.totalorder %s22, 0
      %p61 = por %p59, %p60
      %s62 = ssub.s32 %s24, %s31
      %p63 = scmp.eq.s32.totalorder %s62, 0
      %s65 = sadd.s32 %s64, 1
      %s66 = scalar_select %p63, %s64, %s65
      %p69 = pneg %p63
      %p70 = scmp.eq.s32.totalorder %s16, 2
      %p71 = por %p69, %p70
      %p72 = scmp.ne.s32.totalorder %s64, %s67
      %p73 = scmp.eq.s32.totalorder %s16, 0
      %p74 = por %p72, %p73
      %p75 = scmp.ne.s32.totalorder %s64, %s67
      %p76 = scmp.eq.s32.totalorder %s21, 2
      %p77 = por %p75, %p76
      %p78 = scmp.ne.s32.totalorder %s67, %s68
      %p79 = scmp.eq.s32.totalorder %s21, 0
      %p80 = por %p78, %p79
      %p81 = scmp.ne.s32.totalorder %s67, %s68
      %p82 = scmp.eq.s32.totalorder %s22, 2
      %p83 = por %p81, %p82
      %p85 = scmp.ne.s32.totalorder %s68, %s84
      %p86 = scmp.eq.s32.totalorder %s22, 0
      %p87 = por %p85, %p86
      %s88 = ssub.s32 %s24, %s31
      %p89 = scmp.eq.s32.totalorder %s88, 0
      %s91 = sadd.s32 %s90, 1
      %s92 = scalar_select %p89, %s90, %s91
      %p95 = pneg %p89
      %p96 = scmp.eq.s32.totalorder %s16, 2
      %p97 = por %p95, %p96
      %p98 = scmp.ne.s32.totalorder %s90, %s93
      %p99 = scmp.eq.s32.totalorder %s16, 0
      %p100 = por %p98, %p99
      %p101 = scmp.ne.s32.totalorder %s90, %s93
      %p102 = scmp.eq.s32.totalorder %s21, 2
      %p103 = por %p101, %p102
      %p104 = scmp.ne.s32.totalorder %s93, %s94
      %p105 = scmp.eq.s32.totalorder %s21, 0
      %p106 = por %p104, %p105
      %p107 = scmp.ne.s32.totalorder %s93, %s94
      %p108 = scmp.eq.s32.totalorder %s22, 2
      %p109 = por %p107, %p108
      %p111 = scmp.ne.s32.totalorder %s94, %s110
      %p112 = scmp.eq.s32.totalorder %s22, 0
      %p113 = por %p111, %p112
      %s114 = ssub.s32 %s24, %s31
      %s115 = ssub.s32 %s23, %s35
      %s116 = sor.u32 %s114, %s115
      %p117 = scmp.eq.s32.totalorder %s116, 0
      %s119 = sadd.s32 %s118, 1
      %s120 = scalar_select %p117, %s118, %s119
      %p123 = pneg %p117
      %p124 = scmp.eq.s32.totalorder %s16, 2
      %p125 = por %p123, %p124
      %p126 = scmp.ne.s32.totalorder %s118, %s121
      %p127 = scmp.eq.s32.totalorder %s16, 0
      %p128 = por %p126, %p127
      %p129 = scmp.ne.s32.totalorder %s118, %s121
      %p130 = scmp.eq.s32.totalorder %s21, 2
      %p131 = por %p129, %p130
      %p132 = scmp.ne.s32.totalorder %s121, %s122
      %p133 = scmp.eq.s32.totalorder %s21, 0
      %p134 = por %p132, %p133
      %p135 = scmp.ne.s32.totalorder %s121, %s122
      %p136 = scmp.eq.s32.totalorder %s22, 2
      %p137 = por %p135, %p136
      %p139 = scmp.ne.s32.totalorder %s122, %s138
      %p140 = scmp.eq.s32.totalorder %s22, 0
      %p141 = por %p139, %p140
      %p142 = scmp.le.s32.totalorder 1, %s16
      %p143 = scmp.lt.s32.totalorder %s16, 4
      %p144 = pnand %p142, %p143
      %p145 = pneg %p144
      // Predicated region
      $region9: #{tpu_custom_call.1} parent=5 // pred_check
        _
      $region10: #{tpu_custom_call.1} parent=5 // pred_check_branch
        %147 = sbr.rel (%p144) target = $region12
      $region11: #{tpu_custom_call.1} parent=5 // pred_region
        %s148 = ssub.s32 %s16, 1
        // Predicated region
        $region13: #{tpu_custom_call.1} parent=11 // pred_check
          %p149 = pneg %p54
        $region14: #{tpu_custom_call.1} parent=11 // pred_check_branch
          %151 = sbr.rel (%p149) target = $region16
        $region15: #{tpu_custom_call.1} parent=11 // pred_region
          %s153 = ssub.s32 128, 128
          %154 = vsyncadd [#allocation4], %s153
          %s155 = smul.addr %s25, 128
          %s156 = scalar_lea.hbm %s0, %s155
          %s158 = sshll.u32 [#allocation3], 4
          %s159 = int_to_ptr.vmem [resolvable:$true] %s158
          %161 = dma.hbm_to_vmem [thread:$0]  %s156, 128, %s159, [#allocation4]
        $region16: #{tpu_custom_call.1} parent=11 // pred_fallthru
          _
      $region12: #{tpu_custom_call.1} parent=5 // pred_fallthru
        _
      %p162 = scmp.lt.s32.totalorder %s16, 3
      // Predicated region
      $region17: #{tpu_custom_call.1} parent=5 // pred_check
        %p163 = pneg %p162
      $region18: #{tpu_custom_call.1} parent=5 // pred_check_branch
        %165 = sbr.rel (%p163) target = $region20
      $region19: #{tpu_custom_call.1} parent=5 // pred_region
        // Predicated region
        $region21: #{tpu_custom_call.1} parent=19 // pred_check
          %p166 = pneg %p74
        $region22: #{tpu_custom_call.1} parent=19 // pred_check_branch
          %168 = sbr.rel (%p166) target = $region24
        $region23: #{tpu_custom_call.1} parent=19 // pred_region
          %s169 = sand.u32 %s64, 1
          %s170 = scalar_lea.sflag [#allocation7], %s169
          %s171 = sand.u32 %s64, 1
          %s172 = smul.addr %s171, 256
          %s173 = scalar_lea.vmem [#allocation6], %s172
          %s175 = ssub.s32 4096, 4096
          %176 = vsyncadd %s170, %s175
          %s177 = smul.addr %s24, 32
          %s178 = smul.addr %s177, 128
          %s179 = scalar_lea.hbm %s1, %s178
          %s180 = sshll.u32 %s173, 4
          %s181 = int_to_ptr.vmem [resolvable:$true] %s180
          %186 = dma.hbm_to_vmem [thread:$0]  %s179, 4096, %s181, %s170, 256, 256, 16
        $region24: #{tpu_custom_call.1} parent=19 // pred_fallthru
          _
        // Predicated region
        $region25: #{tpu_custom_call.1} parent=19 // pred_check
          %p187 = pneg %p100
        $region26: #{tpu_custom_call.1} parent=19 // pred_check_branch
          %189 = sbr.rel (%p187) target = $region28
        $region27: #{tpu_custom_call.1} parent=19 // pred_region
          %p190 = scmp.lt.s32.totalorder %s24, 2
          %s191 = scalar_select %p190, %s24, 2
          %s192 = smul.addr %s191, 2
          %s193 = scalar_lea.vmem %s2, %s192
        $region28: #{tpu_custom_call.1} parent=19 // pred_fallthru
          _
      $region20: #{tpu_custom_call.1} parent=5 // pred_fallthru
        _
      %p194 = scmp.le.s32.totalorder 1, %s16
      %p195 = scmp.lt.s32.totalorder %s16, 4
      %p196 = pnand %p194, %p195
      %p197 = pneg %p196
      // Predicated region
      $region29: #{tpu_custom_call.1} parent=5 // pred_check
        _
      $region30: #{tpu_custom_call.1} parent=5 // pred_check_branch
        %199 = sbr.rel (%p196) target = $region32
      $region31: #{tpu_custom_call.1} parent=5 // pred_region
        %s200 = ssub.s32 %s16, 1
        // Predicated region
        $region33: #{tpu_custom_call.1} parent=31 // pred_check
          %p201 = pneg %p54
        $region34: #{tpu_custom_call.1} parent=31 // pred_check_branch
          %203 = sbr.rel (%p201) target = $region36
        $region35: #{tpu_custom_call.1} parent=31 // pred_region
          %204 = dma.done [#allocation4], 128
        $region36: #{tpu_custom_call.1} parent=31 // pred_fallthru
          _
        %s205 = sand.u32 %s67, 1
        %s206 = scalar_lea.sflag [#allocation7], %s205
        %s207 = sand.u32 %s67, 1
        %s208 = smul.addr %s207, 256
        %s209 = scalar_lea.vmem [#allocation6], %s208
        // Predicated region
        $region37: #{tpu_custom_call.1} parent=31 // pred_check
          %p210 = pneg %p80
        $region38: #{tpu_custom_call.1} parent=31 // pred_check_branch
          %212 = sbr.rel (%p210) target = $region40
        $region39: #{tpu_custom_call.1} parent=31 // pred_region
          %213 = dma.done %s206, 4096
        $region40: #{tpu_custom_call.1} parent=31 // pred_fallthru
          _
        %p214 = pneg %p54
        %p215 = pneg %p51
        %s216 = sand.u32 %s67, 1
        %s217 = scalar_lea.sflag [#allocation7], %s216
        %s218 = sand.u32 %s67, 1
        %s219 = smul.addr %s218, 256
        %s220 = scalar_lea.vmem [#allocation6], %s219
        %p221 = pneg %p80
        %p222 = pneg %p77
        %p223 = scmp.lt.s32.totalorder %s26, 2
        %s224 = scalar_select %p223, %s26, 2
        %s225 = smul.addr %s224, 2
        %s226 = scalar_lea.vmem %s2, %s225
        %p227 = pneg %p106
        %p228 = pneg %p103
        %p229 = pneg %p134
        %p230 = pneg %p131
        %s231 = sand.u32 %s121, 1
        %s232 = scalar_lea.sflag [#allocation5], %s231
        %s233 = sand.u32 %s121, 1
        %s234 = smul.addr %s233, 8
        %s235 = scalar_lea.vmem [#allocation8], %s234
        %p236 = scmp.lt.s32.totalorder %s26, 2
        %s237 = scalar_select %p236, %s26, 2
        %s238 = smul.addr %s237, 2
        %s239 = scalar_lea.vmem %s2, %s238
        %p240 = scmp.eq.s32.totalorder %s26, 0
        // Predicated region
        $region41: #{tpu_custom_call.1} parent=31 // pred_check
          %p241 = pneg %p240
        $region42: #{tpu_custom_call.1} parent=31 // pred_check_branch
          %243 = sbr.rel (%p241) target = $region44
        $region43: #{tpu_custom_call.1} parent=31 // pred_region
          %v244 = vld [vmem:[#allocation3] sm:$0xff]
          %245 = vst [vmem:[#allocation2] sm:$0xff] %v244
        $region44: #{tpu_custom_call.1} parent=31 // pred_fallthru
          _
        %v246 = vld [vmem:[#allocation2] sm:$0xff]
        %v247 = vld [vmem:[%s209] sm:$0xff]
        %v248 = vld [vmem:[%s209 + $0x8] sm:$0xff]
        %v249 = vld [vmem:[%s209 + $0x10] sm:$0xff]
        %v250 = vld [vmem:[%s209 + $0x18] sm:$0xff]
        %v251 = vld [vmem:[%s209 + $0x20] sm:$0xff]
        %v252 = vld [vmem:[%s209 + $0x28] sm:$0xff]
        %v253 = vld [vmem:[%s209 + $0x30] sm:$0xff]
        %v254 = vld [vmem:[%s209 + $0x38] sm:$0xff]
        %v255 = vld [vmem:[%s209 + $0x40] sm:$0xff]
        %v256 = vld [vmem:[%s209 + $0x48] sm:$0xff]
        %v257 = vld [vmem:[%s209 + $0x50] sm:$0xff]
        %v258 = vld [vmem:[%s209 + $0x58] sm:$0xff]
        %v259 = vld [vmem:[%s209 + $0x60] sm:$0xff]
        %v260 = vld [vmem:[%s209 + $0x68] sm:$0xff]
        %v261 = vld [vmem:[%s209 + $0x70] sm:$0xff]
        %v262 = vld [vmem:[%s209 + $0x78] sm:$0xff]
        %v263 = vld [vmem:[%s209 + $0x80] sm:$0xff]
        %v264 = vld [vmem:[%s209 + $0x88] sm:$0xff]
        %v265 = vld [vmem:[%s209 + $0x90] sm:$0xff]
        %v266 = vld [vmem:[%s209 + $0x98] sm:$0xff]
        %v267 = vld [vmem:[%s209 + $0xa0] sm:$0xff]
        %v268 = vld [vmem:[%s209 + $0xa8] sm:$0xff]
        %v269 = vld [vmem:[%s209 + $0xb0] sm:$0xff]
        %v270 = vld [vmem:[%s209 + $0xb8] sm:$0xff]
        %v271 = vld [vmem:[%s209 + $0xc0] sm:$0xff]
        %v272 = vld [vmem:[%s209 + $0xc8] sm:$0xff]
        %v273 = vld [vmem:[%s209 + $0xd0] sm:$0xff]
        %v274 = vld [vmem:[%s209 + $0xd8] sm:$0xff]
        %v275 = vld [vmem:[%s209 + $0xe0] sm:$0xff]
        %v276 = vld [vmem:[%s209 + $0xe8] sm:$0xff]
        %v277 = vld [vmem:[%s209 + $0xf0] sm:$0xff]
        %v278 = vld [vmem:[%s209 + $0xf8] sm:$0xff]
        %v279 = vld [vmem:[%s239] sm:$0x3]
        %v281 = vlaneseq
        %v282 = vshrl.u32 %v281, 7
        %v283 = vsub.s32 0, %v282
        %v284 = vrot.slane %v279, %v283
        %v285 = vlaneseq
        %v286 = vshrl.u32 %v285, 7
        %v287 = vsub.s32 1, %v286
        %v288 = vrot.slane %v279, %v287
        %291 = vmatprep.subr.mxu0 %v248
        %292 = vmatpush1.msra.mxu0 %v247
        %293 = vmatprep.subr.mxu0 %v250
        %294 = vmatpush1.msra.mxu0 %v249
        %295 = vmatprep.subr.mxu0 %v252
        %296 = vmatpush1.msra.mxu0 %v251
        %297 = vmatprep.subr.mxu0 %v254
        %298 = vmatpush1.msra.mxu0 %v253
        %299 = vmatprep.subr.mxu0 %v256
        %300 = vmatpush1.msra.mxu0 %v255
        %301 = vmatprep.subr.mxu0 %v258
        %302 = vmatpush1.msra.mxu0 %v257
        %303 = vmatprep.subr.mxu0 %v260
        %304 = vmatpush1.msra.mxu0 %v259
        %305 = vmatprep.subr.mxu0 %v262
        %306 = vmatpush1.msra.mxu0 %v261
        %307 = vmatprep.subr.mxu0 %v264
        %308 = vmatpush1.msra.mxu0 %v263
        %309 = vmatprep.subr.mxu0 %v266
        %310 = vmatpush1.msra.mxu0 %v265
        %311 = vmatprep.subr.mxu0 %v268
        %312 = vmatpush1.msra.mxu0 %v267
        %313 = vmatprep.subr.mxu0 %v270
        %314 = vmatpush1.msra.mxu0 %v269
        %315 = vmatprep.subr.mxu0 %v272
        %316 = vmatpush1.msra.mxu0 %v271
        %317 = vmatprep.subr.mxu0 %v274
        %318 = vmatpush1.msra.mxu0 %v273
        %319 = vmatprep.subr.mxu0 %v276
        %320 = vmatpush1.msra.mxu0 %v275
        %321 = vmatprep.subr.mxu0 %v278
        %322 = vmatpush1.msra.mxu0 %v277
        %323 = vmatprep.subr.mxu0 0.0
        %324 = vmatpush1.msra.mxu0 0.0
        %325 = vmatprep.subr.mxu0 0.0
        %326 = vmatpush1.msra.mxu0 0.0
        %327 = vmatprep.subr.mxu0 0.0
        %328 = vmatpush1.msra.mxu0 0.0
        %329 = vmatprep.subr.mxu0 0.0
        %330 = vmatpush1.msra.mxu0 0.0
        %331 = vmatprep.subr.mxu0 0.0
        %332 = vmatpush1.msra.mxu0 0.0
        %333 = vmatprep.subr.mxu0 0.0
        %334 = vmatpush1.msra.mxu0 0.0
        %335 = vmatprep.subr.mxu0 0.0
        %336 = vmatpush1.msra.mxu0 0.0
        %337 = vmatprep.subr.mxu0 0.0
        %338 = vmatpush1.msra.mxu0 0.0
        %339 = vmatprep.subr.mxu0 0.0
        %340 = vmatpush1.msra.mxu0 0.0
        %341 = vmatprep.subr.mxu0 0.0
        %342 = vmatpush1.msra.mxu0 0.0
        %343 = vmatprep.subr.mxu0 0.0
        %344 = vmatpush1.msra.mxu0 0.0
        %345 = vmatprep.subr.mxu0 0.0
        %346 = vmatpush1.msra.mxu0 0.0
        %347 = vmatprep.subr.mxu0 0.0
        %348 = vmatpush1.msra.mxu0 0.0
        %349 = vmatprep.subr.mxu0 0.0
        %350 = vmatpush1.msra.mxu0 0.0
        %351 = vmatprep.subr.mxu0 0.0
        %352 = vmatpush1.msra.mxu0 0.0
        %353 = vmatprep.subr.mxu0 0.0
        %354 = vmatpush1.msra.mxu0 0.0
        %355 = vmatprep.mubr.f32.mxu0 0.0
        %356 = vmatmul.mubr.f32.gmra.mrb[0].mxu0 %v246
        %v357 = vpop.f32.mrb[0].mxu0
        %v358 = vadd.f32 %v284, %v357
        %v359 = vpop.f32.mrb[0].mxu0
        %v360 = vadd.f32 %v288, %v359
        %361 = vdwg.mxu0
        %362 = vst [vmem:[%s235] sm:$0xff] %v360
        %363 = vst [vmem:[#allocation2] sm:$0xff] %v358
        %s364 = sand.u32 %s121, 1
        %s365 = scalar_lea.sflag [#allocation5], %s364
        %s366 = sand.u32 %s121, 1
        %s367 = smul.addr %s366, 8
        %s368 = scalar_lea.vmem [#allocation8], %s367
        // Predicated region
        $region45: #{tpu_custom_call.1} parent=31 // pred_check
          %p369 = pneg %p131
        $region46: #{tpu_custom_call.1} parent=31 // pred_check_branch
          %371 = sbr.rel (%p369) target = $region48
        $region47: #{tpu_custom_call.1} parent=31 // pred_region
          %s373 = ssub.s32 128, 128
          %374 = vsyncadd %s365, %s373
          %s375 = sadd.s32 %s25, %s26
          %s376 = smul.addr %s375, 128
          %s377 = scalar_lea.hbm %s3, %s376
          %s379 = sshll.u32 %s368, 4
          %s380 = int_to_ptr.vmem [resolvable:$true] %s379
          %382 = dma.vmem_to_hbm [thread:$0]  %s380, 128, %s377, %s365
        $region48: #{tpu_custom_call.1} parent=31 // pred_fallthru
          _
      $region32: #{tpu_custom_call.1} parent=5 // pred_fallthru
        _
      %p383 = scmp.le.s32.totalorder 2, %s16
      // Predicated region
      $region49: #{tpu_custom_call.1} parent=5 // pred_check
        %p384 = pneg %p383
      $region50: #{tpu_custom_call.1} parent=5 // pred_check_branch
        %386 = sbr.rel (%p384) target = $region52
      $region51: #{tpu_custom_call.1} parent=5 // pred_region
        %s387 = ssub.s32 %s16, 2
        // Predicated region
        $region53: #{tpu_custom_call.1} parent=51 // pred_check
          %p388 = pneg %p137
        $region54: #{tpu_custom_call.1} parent=51 // pred_check_branch
          %390 = sbr.rel (%p388) target = $region56
        $region55: #{tpu_custom_call.1} parent=51 // pred_region
          %s391 = sand.u32 %s122, 1
          %s392 = scalar_lea.sflag [#allocation5], %s391
          %s393 = sand.u32 %s122, 1
          %s394 = smul.addr %s393, 8
          %s395 = scalar_lea.vmem [#allocation8], %s394
          %396 = dma.done %s392, 128
        $region56: #{tpu_custom_call.1} parent=51 // pred_fallthru
          _
      $region52: #{tpu_custom_call.1} parent=5 // pred_fallthru
        _
    $region6: #{tpu_custom_call.1} parent=1 // loop_footer
      %s20 = sadd.s32 1, %s16
    $region7: #{tpu_custom_call.1} parent=1 // loop_footer_branch
      %15 = sbr.rel target = $region3
    $region8: #{tpu_custom_call.1} parent=1 // loop_exit
      _
    %397 = vsyncpa [#allocation4], 1
    %s398 = scalar_lea.sflag [#allocation4], 1
    %399 = vsyncpa %s398, 1
    %400 = vsyncpa [#allocation7], 1
    %s401 = scalar_lea.sflag [#allocation7], 1
    %402 = vsyncpa %s401, 1
    %403 = vsyncpa [#allocation5], 1
    %s404 = scalar_lea.sflag [#allocation5], 1
    %405 = vsyncpa %s404, 1

</llo_original>
